<compile_context>
chip_gen: v7x
topology: tpu7x:2x2x1
jax: 0.10.0
libtpu: 0.0.40
codegen_flags: <defaults>
</compile_context>

<pallas_src>
import functools

import jax
import jax.numpy as jnp
from jax.experimental import pallas as pl
from jax.experimental.pallas import tpu as pltpu


def _round_up(n, m):
    return ((n + m - 1) // m) * m


def _fused_mlp_kernel(x_ref,
                      w1_ref, b1_ref,
                      w2_ref, b2_ref,
                      wh1_ref, bh1_ref,
                      wh2_ref, bh2_ref,
                      out_ref,
                      *, out_size):
    x = x_ref[...]

    # trunk: fc1 -> relu -> fc2 -> relu (f32 accumulation on the MXU)
    h = jnp.dot(x, w1_ref[...], preferred_element_type=jnp.float32) + b1_ref[...]
    h = jnp.maximum(h, 0.0)
    h = jnp.dot(h.astype(w2_ref.dtype), w2_ref[...],
                preferred_element_type=jnp.float32) + b2_ref[...]
    h = jnp.maximum(h, 0.0)

    # fused head hidden layer: [prob_hidden || time_hidden] in one matmul
    hh = jnp.dot(h.astype(wh1_ref.dtype), wh1_ref[...],
                 preferred_element_type=jnp.float32) + bh1_ref[...]
    hh = jnp.maximum(hh, 0.0)

    # fused block-diagonal last layer, width = 2*out_size (no lane padding):
    #   cols [0:out_size)           -> event-time logits (ReLU)
    #   cols [out_size:2*out_size)  -> probability logits (sigmoid)
    z = jnp.dot(hh.astype(wh2_ref.dtype), wh2_ref[...],
                preferred_element_type=jnp.float32) + bh2_ref[...]
    col = jax.lax.broadcasted_iota(jnp.int32, z.shape, 1)
    t_part = jnp.maximum(z, 0.0)
    # stable sigmoid via tanh (EUP): sigmoid(z) = 0.5 * (tanh(z/2) + 1)
    p_part = 0.5 * (jnp.tanh(0.5 * z) + 1.0)
    out_ref[...] = jnp.where(col < out_size, t_part, p_part).astype(out_ref.dtype)


def fuse_params(params, compute_dtype=jnp.float32):
    """Fuses the two heads into concatenated / block-diagonal forms.

    If compute_dtype is bf16, only the matmul operand matrices are cast;
    biases stay f32 (added after f32 accumulation).
    """
    (w1, b1, w2, b2, wp1, bp1, wp2, bp2, wt1, bt1, wt2, bt2) = params
    ph = wp1.shape[1]
    out_size = wp2.shape[1]

    # first head layers: one matmul producing [hp || ht]
    wh1 = jnp.concatenate([wp1, wt1], axis=1)               # [sh, ph+th]
    bh1 = jnp.concatenate([bp1, bt1], axis=1)                # [1, ph+th]

    # second head layers: block-diagonal, t in cols [0:out), p in [out:2*out)
    wh2 = jnp.zeros((wh1.shape[1], 2 * out_size), jnp.float32)
    wh2 = wh2.at[ph:, :out_size].set(wt2)                    # time head -> t cols
    wh2 = wh2.at[:ph, out_size:].set(wp2)                    # prob head -> p cols
    bh2 = jnp.concatenate([bt2, bp2], axis=1)                 # [1, 2*out]

    if compute_dtype != jnp.float32:
        w1 = w1.astype(compute_dtype)
        w2 = w2.astype(compute_dtype)
        wh1 = wh1.astype(compute_dtype)
        wh2 = wh2.astype(compute_dtype)

    return (w1, b1, w2, b2, wh1, bh1, wh2, bh2), out_size


def simulation_nn_forward(x, fused_params, out_size, *, tb=4096):
    """Full two-head MLP forward pass in one batch-tiled Pallas kernel.

    Returns (t, p) matching the PyTorch module's output order.
    """
    (w1, b1, w2, b2, wh1, bh1, wh2, bh2) = fused_params
    B, in_size = x.shape
    out_w = wh2.shape[1]                       # 2 * out_size
    compute_dtype = w1.dtype
    x = x.astype(compute_dtype)

    # Batch tile: multiple of 8 sublanes (both tb and B rounded up), capped at tb.
    tb = max(8, _round_up(tb, 8))
    B8 = _round_up(B, 8)
    TB = min(tb, B8)
    # v7x megacore: prefer >= 2 grid steps so the "parallel" axis uses both TCs.
    if B8 >= 16 and pl.cdiv(B8, TB) < 2:
        TB = _round_up(pl.cdiv(B8, 2), 8)
    Bp = _round_up(B, TB)
    if Bp != B:
        x = jnp.pad(x, ((0, Bp - B), (0, 0)))

    grid = (pl.cdiv(Bp, TB),)
    batch_map = lambda i: (i, 0)        # x / output tiles advance with the grid
    resident_map = lambda i: (0, 0)     # weights stay resident in VMEM

    weights = (w1, b1, w2, b2, wh1, bh1, wh2, bh2)
    kernel = functools.partial(_fused_mlp_kernel, out_size=out_size)

    out = pl.pallas_call(
        kernel,
        grid=grid,
        in_specs=[pl.BlockSpec((TB, in_size), batch_map)]
        + [pl.BlockSpec(w.shape, resident_map) for w in weights],
        out_specs=pl.BlockSpec((TB, out_w), batch_map),
        out_shape=jax.ShapeDtypeStruct((Bp, out_w), jnp.float32),
        compiler_params=pltpu.CompilerParams(
            dimension_semantics=("parallel",),   # megacore sharding on v7x
        ),
    )(x, *weights)

    out = out[:B]
    t = out[:, :out_size]
    p = out[:, out_size:]
    return t, p


def init_params(key, input_size, first_hidden, second_hidden,
                prob_hidden, time_hidden, output_size):
    """Deterministic init mimicking torch.nn.Linear's U(-1/sqrt(fan_in), +)."""
    def linear(k, fan_in, fan_out):
        kw, kb = jax.random.split(k)
        bound = 1.0 / jnp.sqrt(fan_in)
        w = jax.random.uniform(kw, (fan_in, fan_out), jnp.float32, -bound, bound)
        b = jax.random.uniform(kb, (1, fan_out), jnp.float32, -bound, bound)
        return w, b

    keys = jax.random.split(key, 6)
    w1, b1 = linear(keys[0], input_size, first_hidden)
    w2, b2 = linear(keys[1], first_hidden, second_hidden)
    wp1, bp1 = linear(keys[2], second_hidden, prob_hidden)
    wp2, bp2 = linear(keys[3], prob_hidden, output_size)
    wt1, bt1 = linear(keys[4], second_hidden, time_hidden)
    wt2, bt2 = linear(keys[5], time_hidden, output_size)
    return (w1, b1, w2, b2, wp1, bp1, wp2, bp2, wt1, bt1, wt2, bt2)


def reference_forward(x, params):
    """Pure-JAX reference (unfused) for correctness checking."""
    (w1, b1, w2, b2, wp1, bp1, wp2, bp2, wt1, bt1, wt2, bt2) = params
    h = jnp.maximum(x @ w1 + b1, 0.0)
    h = jnp.maximum(h @ w2 + b2, 0.0)
    p = jnp.maximum(h @ wp1 + bp1, 0.0)
    p = jax.nn.sigmoid(p @ wp2 + bp2)
    t = jnp.maximum(h @ wt1 + bt1, 0.0)
    t = jnp.maximum(t @ wt2 + bt2, 0.0)
    return t, p


if __name__ == "__main__":
    # Small, forward-consistent sizes; batch large enough to exercise a 2-step grid.
    batch = 256
    input_size = 16
    first_hidden = 32
    second_hidden = 32
    prob_hidden = 24
    time_hidden = 24
    output_size = 8

    key = jax.random.PRNGKey(0)
    kx, kp = jax.random.split(key)
    x = jax.random.normal(kx, (batch, input_size), jnp.float32)
    params = init_params(kp, input_size, first_hidden, second_hidden,
                         prob_hidden, time_hidden, output_size)
    t_ref, p_ref = reference_forward(x, params)

    # f32 path (tight tolerance check).
    fused_f32, out_size = fuse_params(params, compute_dtype=jnp.float32)
    t, p = simulation_nn_forward(x, fused_f32, out_size)   # default tb -> grid=(2,)
    jax.block_until_ready((t, p))
    assert t.shape == (batch, output_size) and p.shape == (batch, output_size)
    assert jnp.allclose(t, t_ref, atol=1e-5, rtol=1e-5)
    assert jnp.allclose(p, p_ref, atol=1e-5, rtol=1e-5)

    # bf16 matmul-operand path (recommended on v6e/v7x), f32 accumulation.
    fused_bf16, _ = fuse_params(params, compute_dtype=jnp.bfloat16)
    t16, p16 = simulation_nn_forward(x, fused_bf16, out_size)
    jax.block_until_ready((t16, p16))
    assert jnp.allclose(t16, t_ref, atol=1e-1, rtol=1e-1)
    assert jnp.allclose(p16, p_ref, atol=1e-1, rtol=1e-1)

    print("KERNEL_OK")
</pallas_src>

<mosaic_0001>
module attributes {stable_mosaic.version = 11 : i64} {
  func.func @_fused_mlp_kernel(%arg0: i32, %arg1: memref<128x16xf32, #tpu.memory_space<vmem>>, %arg2: memref<16x32xf32, #tpu.memory_space<vmem>>, %arg3: memref<1x32xf32, #tpu.memory_space<vmem>>, %arg4: memref<32x32xf32, #tpu.memory_space<vmem>>, %arg5: memref<1x32xf32, #tpu.memory_space<vmem>>, %arg6: memref<32x48xf32, #tpu.memory_space<vmem>>, %arg7: memref<1x48xf32, #tpu.memory_space<vmem>>, %arg8: memref<48x16xf32, #tpu.memory_space<vmem>>, %arg9: memref<1x16xf32, #tpu.memory_space<vmem>>, %arg10: memref<128x16xf32, #tpu.memory_space<vmem>>) attributes {dimension_semantics = [#tpu.dimension_semantics<parallel>], iteration_bounds = array<i64: 2>, scalar_prefetch = 0 : i64, scratch_operands = 0 : i64, tpu.core_type = #tpu.core_type<tc>, window_params = [{transform_indices = @transform_0, window_bounds = array<i64: 128, 16>}, {pipeline_mode = #tpu.pipeline_mode<synchronous>, transform_indices = @transform_1, window_bounds = array<i64: 16, 32>}, {pipeline_mode = #tpu.pipeline_mode<synchronous>, transform_indices = @transform_2, window_bounds = array<i64: 1, 32>}, {pipeline_mode = #tpu.pipeline_mode<synchronous>, transform_indices = @transform_3, window_bounds = array<i64: 32, 32>}, {pipeline_mode = #tpu.pipeline_mode<synchronous>, transform_indices = @transform_4, window_bounds = array<i64: 1, 32>}, {pipeline_mode = #tpu.pipeline_mode<synchronous>, transform_indices = @transform_5, window_bounds = array<i64: 32, 48>}, {pipeline_mode = #tpu.pipeline_mode<synchronous>, transform_indices = @transform_6, window_bounds = array<i64: 1, 48>}, {pipeline_mode = #tpu.pipeline_mode<synchronous>, transform_indices = @transform_7, window_bounds = array<i64: 48, 16>}, {pipeline_mode = #tpu.pipeline_mode<synchronous>, transform_indices = @transform_8, window_bounds = array<i64: 1, 16>}, {transform_indices = @transform_9, window_bounds = array<i64: 128, 16>}]} {
    %c0 = arith.constant 0 : index
    %c0_0 = arith.constant 0 : index
    %0 = vector.load %arg1[%c0, %c0_0] : memref<128x16xf32, #tpu.memory_space<vmem>>, vector<128x16xf32>
    %c0_1 = arith.constant 0 : index
    %c0_2 = arith.constant 0 : index
    %1 = vector.load %arg2[%c0_1, %c0_2] : memref<16x32xf32, #tpu.memory_space<vmem>>, vector<16x32xf32>
    %cst = arith.constant dense<0.000000e+00> : vector<128x32xf32>
    %2 = tpu.matmul %0, %1, %cst {dimension_numbers = #tpu.dot_dimension_numbers<[1], [0], [0], [1], [0, 0, 1, 1], [], []>} : vector<128x16xf32>, vector<16x32xf32>, vector<128x32xf32> -> vector<128x32xf32>
    %c0_3 = arith.constant 0 : index
    %c0_4 = arith.constant 0 : index
    %3 = vector.load %arg3[%c0_3, %c0_4] : memref<1x32xf32, #tpu.memory_space<vmem>>, vector<1x32xf32>
    %4 = vector.broadcast %3 : vector<1x32xf32> to vector<128x32xf32>
    %5 = arith.addf %2, %4 : vector<128x32xf32>
    %cst_5 = arith.constant 0.000000e+00 : f32
    %6 = vector.broadcast %cst_5 : f32 to vector<128x32xf32>
    %7 = arith.maximumf %5, %6 : vector<128x32xf32>
    %c0_6 = arith.constant 0 : index
    %c0_7 = arith.constant 0 : index
    %8 = vector.load %arg4[%c0_6, %c0_7] : memref<32x32xf32, #tpu.memory_space<vmem>>, vector<32x32xf32>
    %cst_8 = arith.constant dense<0.000000e+00> : vector<128x32xf32>
    %9 = tpu.matmul %7, %8, %cst_8 {dimension_numbers = #tpu.dot_dimension_numbers<[1], [0], [0], [1], [0, 0, 1, 1], [], []>} : vector<128x32xf32>, vector<32x32xf32>, vector<128x32xf32> -> vector<128x32xf32>
    %c0_9 = arith.constant 0 : index
    %c0_10 = arith.constant 0 : index
    %10 = vector.load %arg5[%c0_9, %c0_10] : memref<1x32xf32, #tpu.memory_space<vmem>>, vector<1x32xf32>
    %11 = vector.broadcast %10 : vector<1x32xf32> to vector<128x32xf32>
    %12 = arith.addf %9, %11 : vector<128x32xf32>
    %cst_11 = arith.constant 0.000000e+00 : f32
    %13 = vector.broadcast %cst_11 : f32 to vector<128x32xf32>
    %14 = arith.maximumf %12, %13 : vector<128x32xf32>
    %c0_12 = arith.constant 0 : index
    %c0_13 = arith.constant 0 : index
    %15 = vector.load %arg6[%c0_12, %c0_13] : memref<32x48xf32, #tpu.memory_space<vmem>>, vector<32x48xf32>
    %cst_14 = arith.constant dense<0.000000e+00> : vector<128x48xf32>
    %16 = tpu.matmul %14, %15, %cst_14 {dimension_numbers = #tpu.dot_dimension_numbers<[1], [0], [0], [1], [0, 0, 1, 1], [], []>} : vector<128x32xf32>, vector<32x48xf32>, vector<128x48xf32> -> vector<128x48xf32>
    %c0_15 = arith.constant 0 : index
    %c0_16 = arith.constant 0 : index
    %17 = vector.load %arg7[%c0_15, %c0_16] : memref<1x48xf32, #tpu.memory_space<vmem>>, vector<1x48xf32>
    %18 = vector.broadcast %17 : vector<1x48xf32> to vector<128x48xf32>
    %19 = arith.addf %16, %18 : vector<128x48xf32>
    %cst_17 = arith.constant 0.000000e+00 : f32
    %20 = vector.broadcast %cst_17 : f32 to vector<128x48xf32>
    %21 = arith.maximumf %19, %20 : vector<128x48xf32>
    %c0_18 = arith.constant 0 : index
    %c0_19 = arith.constant 0 : index
    %22 = vector.load %arg8[%c0_18, %c0_19] : memref<48x16xf32, #tpu.memory_space<vmem>>, vector<48x16xf32>
    %cst_20 = arith.constant dense<0.000000e+00> : vector<128x16xf32>
    %23 = tpu.matmul %21, %22, %cst_20 {dimension_numbers = #tpu.dot_dimension_numbers<[1], [0], [0], [1], [0, 0, 1, 1], [], []>} : vector<128x48xf32>, vector<48x16xf32>, vector<128x16xf32> -> vector<128x16xf32>
    %c0_21 = arith.constant 0 : index
    %c0_22 = arith.constant 0 : index
    %24 = vector.load %arg9[%c0_21, %c0_22] : memref<1x16xf32, #tpu.memory_space<vmem>>, vector<1x16xf32>
    %25 = vector.broadcast %24 : vector<1x16xf32> to vector<128x16xf32>
    %26 = arith.addf %23, %25 : vector<128x16xf32>
    %27 = tpu.iota {dimensions = array<i32: 1>} : vector<128x16xi32>
    %cst_23 = arith.constant 0.000000e+00 : f32
    %28 = vector.broadcast %cst_23 : f32 to vector<128x16xf32>
    %29 = arith.maximumf %26, %28 : vector<128x16xf32>
    %cst_24 = arith.constant 5.000000e-01 : f32
    %30 = vector.broadcast %cst_24 : f32 to vector<128x16xf32>
    %31 = arith.mulf %30, %26 : vector<128x16xf32>
    %32 = math.tanh %31 : vector<128x16xf32>
    %cst_25 = arith.constant 1.000000e+00 : f32
    %33 = vector.broadcast %cst_25 : f32 to vector<128x16xf32>
    %34 = arith.addf %32, %33 : vector<128x16xf32>
    %cst_26 = arith.constant 5.000000e-01 : f32
    %35 = vector.broadcast %cst_26 : f32 to vector<128x16xf32>
    %36 = arith.mulf %35, %34 : vector<128x16xf32>
    %c8_i32 = arith.constant 8 : i32
    %37 = vector.broadcast %c8_i32 : i32 to vector<128x16xi32>
    %38 = arith.cmpi slt, %27, %37 : vector<128x16xi32>
    %39 = arith.select %38, %29, %36 : vector<128x16xi1>, vector<128x16xf32>
    %c0_27 = arith.constant 0 : index
    %c0_28 = arith.constant 0 : index
    %40 = vector.load %arg10[%c0_27, %c0_28] : memref<128x16xf32, #tpu.memory_space<vmem>>, vector<128x16xf32>
    tpu.vector_store %arg10[%c0_27, %c0_28], %39 {strides = array<i32>} : memref<128x16xf32, #tpu.memory_space<vmem>>, vector<128x16xf32>,
    return
  }
  func.func @transform_0(%arg0: i32) -> (i32, i32) {
    %c0_i32 = arith.constant 0 : i32
    %c0_i32_0 = arith.constant 0 : i32
    return %arg0, %c0_i32 : i32, i32
  }
  func.func @transform_1(%arg0: i32) -> (i32, i32) {
    %c0_i32 = arith.constant 0 : i32
    %c0_i32_0 = arith.constant 0 : i32
    %c0_i32_1 = arith.constant 0 : i32
    return %c0_i32, %c0_i32_0 : i32, i32
  }
  func.func @transform_2(%arg0: i32) -> (i32, i32) {
    %c0_i32 = arith.constant 0 : i32
    %c0_i32_0 = arith.constant 0 : i32
    %c0_i32_1 = arith.constant 0 : i32
    return %c0_i32, %c0_i32_0 : i32, i32
  }
  func.func @transform_3(%arg0: i32) -> (i32, i32) {
    %c0_i32 = arith.constant 0 : i32
    %c0_i32_0 = arith.constant 0 : i32
    %c0_i32_1 = arith.constant 0 : i32
    return %c0_i32, %c0_i32_0 : i32, i32
  }
  func.func @transform_4(%arg0: i32) -> (i32, i32) {
    %c0_i32 = arith.constant 0 : i32
    %c0_i32_0 = arith.constant 0 : i32
    %c0_i32_1 = arith.constant 0 : i32
    return %c0_i32, %c0_i32_0 : i32, i32
  }
  func.func @transform_5(%arg0: i32) -> (i32, i32) {
    %c0_i32 = arith.constant 0 : i32
    %c0_i32_0 = arith.constant 0 : i32
    %c0_i32_1 = arith.constant 0 : i32
    return %c0_i32, %c0_i32_0 : i32, i32
  }
  func.func @transform_6(%arg0: i32) -> (i32, i32) {
    %c0_i32 = arith.constant 0 : i32
    %c0_i32_0 = arith.constant 0 : i32
    %c0_i32_1 = arith.constant 0 : i32
    return %c0_i32, %c0_i32_0 : i32, i32
  }
  func.func @transform_7(%arg0: i32) -> (i32, i32) {
    %c0_i32 = arith.constant 0 : i32
    %c0_i32_0 = arith.constant 0 : i32
    %c0_i32_1 = arith.constant 0 : i32
    return %c0_i32, %c0_i32_0 : i32, i32
  }
  func.func @transform_8(%arg0: i32) -> (i32, i32) {
    %c0_i32 = arith.constant 0 : i32
    %c0_i32_0 = arith.constant 0 : i32
    %c0_i32_1 = arith.constant 0 : i32
    return %c0_i32, %c0_i32_0 : i32, i32
  }
  func.func @transform_9(%arg0: i32) -> (i32, i32) {
    %c0_i32 = arith.constant 0 : i32
    %c0_i32_0 = arith.constant 0 : i32
    return %arg0, %c0_i32 : i32, i32
  }
}

</mosaic_0001>

<llo_original>
// kernel: tpu_custom_call.1
$region0: #{tpu_custom_call.1}
  #allocation0 [shape = 'u32[]', space=smem, size = 0x4, offset = 0x4, fixed_abs, tag = 'smem constant byte address 0x4 - core index']
  #allocation1 [shape = 'u32[144,128]{1,0:T(1,128)}', space=vmem, size = 0x12000, scoped, tag = 'internal scratch']
  %s0 = inlined_call_operand.vmem [shape: f32[256,16], index: 0, kind: input, shape index: {}]
  %s1 = inlined_call_operand.vmem [shape: f32[16,32], index: 1, kind: input, shape index: {}]
  %s2 = inlined_call_operand.vmem [shape: f32[1,32], index: 2, kind: input, shape index: {}]
  %s3 = inlined_call_operand.vmem [shape: f32[32,32], index: 3, kind: input, shape index: {}]
  %s4 = inlined_call_operand.vmem [shape: f32[1,32], index: 4, kind: input, shape index: {}]
  %s5 = inlined_call_operand.vmem [shape: f32[32,48], index: 5, kind: input, shape index: {}]
  %s6 = inlined_call_operand.vmem [shape: f32[1,48], index: 6, kind: input, shape index: {}]
  %s7 = inlined_call_operand.vmem [shape: f32[48,16], index: 7, kind: input, shape index: {}]
  %s8 = inlined_call_operand.vmem [shape: f32[1,16], index: 8, kind: input, shape index: {}]
  %s9 = inlined_call_operand.vmem [shape: f32[256,16], index: 9, kind: output, shape index: {}]
  %s10 = sld [smem:[#allocation0]]
  $region69: #{tpu_custom_call.1} parent=0
    _
  %s12 = ssub.s32 1, %s10
  %s13 = scalar_select 0, %s12, %s10
  loop: start=0, step=1, limit=4
  $region2: #{tpu_custom_call.1} parent=0 // loop_pre_header
    _
  $region3: #{tpu_custom_call.1} parent=0 // loop_header
    %s15 = sphi 0, %s19
    %p16 = scmp.ge.s32.totalorder %s15, 4
    %s25 = sphi 0, %s27
    %s28 = sphi 0, %s25
    %s29 = sphi 0, %s28
    %s45 = sphi 0, %s29
    %s49 = sphi 0, %s49
    %s51 = sphi 0, %s49
    %s52 = sphi 0, %s51
    %s66 = sphi 0, %s52
    %s70 = sphi 0, %s70
    %s72 = sphi 0, %s70
    %s73 = sphi 0, %s72
    %s87 = sphi 0, %s73
    %s91 = sphi 0, %s91
    %s93 = sphi 0, %s91
    %s94 = sphi 0, %s93
    %s108 = sphi 0, %s94
    %s112 = sphi 0, %s112
    %s114 = sphi 0, %s112
    %s115 = sphi 0, %s114
    %s129 = sphi 0, %s115
    %s133 = sphi 0, %s133
    %s135 = sphi 0, %s133
    %s136 = sphi 0, %s135
    %s150 = sphi 0, %s136
    %s154 = sphi 0, %s154
    %s156 = sphi 0, %s154
    %s157 = sphi 0, %s156
    %s171 = sphi 0, %s157
    %s175 = sphi 0, %s175
    %s177 = sphi 0, %s175
    %s178 = sphi 0, %s177
    %s192 = sphi 0, %s178
    %s196 = sphi 0, %s196
    %s198 = sphi 0, %s196
    %s199 = sphi 0, %s198
    %s213 = sphi 0, %s199
    %s219 = sphi 0, %s221
    %s222 = sphi 0, %s219
    %s223 = sphi 0, %s222
    %s239 = sphi 0, %s223
  $region4: #{tpu_custom_call.1} parent=0 // loop_header_branch
    %18 = sbr.rel (%p16) target = $region8
  $region5: #{tpu_custom_call.1} parent=0 // loop_body
    %s20 = ssub.s32 %s15, 1
    %s21 = ssub.s32 %s15, 2
    %s22 = sadd.s32 %s15, 1
    %s23 = ssub.s32 %s15, %s22
    %p24 = scmp.eq.s32.totalorder %s23, 0
    %s26 = sadd.s32 %s25, 1
    %s27 = scalar_select %p24, %s25, %s26
    %p30 = pneg %p24
    %p31 = scmp.eq.s32.totalorder %s15, 1
    %p32 = por %p30, %p31
    %p33 = scmp.ne.s32.totalorder %s25, %s28
    %p34 = scmp.eq.s32.totalorder %s15, 0
    %p35 = por %p33, %p34
    %p36 = scmp.ne.s32.totalorder %s25, %s28
    %p37 = scmp.eq.s32.totalorder %s20, 1
    %p38 = por %p36, %p37
    %p39 = scmp.ne.s32.totalorder %s28, %s29
    %p40 = scmp.eq.s32.totalorder %s20, 0
    %p41 = por %p39, %p40
    %p42 = scmp.ne.s32.totalorder %s28, %s29
    %p43 = scmp.eq.s32.totalorder %s21, 1
    %p44 = por %p42, %p43
    %p46 = scmp.ne.s32.totalorder %s29, %s45
    %p47 = scmp.eq.s32.totalorder %s21, 0
    %p48 = por %p46, %p47
    %s50 = sadd.s32 %s49, 1
    %p53 = scmp.eq.s32.totalorder %s15, 1
    %p54 = scmp.ne.s32.totalorder %s49, %s51
    %p55 = scmp.eq.s32.totalorder %s15, 0
    %p56 = por %p54, %p55
    %p57 = scmp.ne.s32.totalorder %s49, %s51
    %p58 = scmp.eq.s32.totalorder %s20, 1
    %p59 = por %p57, %p58
    %p60 = scmp.ne.s32.totalorder %s51, %s52
    %p61 = scmp.eq.s32.totalorder %s20, 0
    %p62 = por %p60, %p61
    %p63 = scmp.ne.s32.totalorder %s51, %s52
    %p64 = scmp.eq.s32.totalorder %s21, 1
    %p65 = por %p63, %p64
    %p67 = scmp.ne.s32.totalorder %s52, %s66
    %p68 = scmp.eq.s32.totalorder %s21, 0
    %p69 = por %p67, %p68
    %s71 = sadd.s32 %s70, 1
    %p74 = scmp.eq.s32.totalorder %s15, 1
    %p75 = scmp.ne.s32.totalorder %s70, %s72
    %p76 = scmp.eq.s32.totalorder %s15, 0
    %p77 = por %p75, %p76
    %p78 = scmp.ne.s32.totalorder %s70, %s72
    %p79 = scmp.eq.s32.totalorder %s20, 1
    %p80 = por %p78, %p79
    %p81 = scmp.ne.s32.totalorder %s72, %s73
    %p82 = scmp.eq.s32.totalorder %s20, 0
    %p83 = por %p81, %p82
    %p84 = scmp.ne.s32.totalorder %s72, %s73
    %p85 = scmp.eq.s32.totalorder %s21, 1
    %p86 = por %p84, %p85
    %p88 = scmp.ne.s32.totalorder %s73, %s87
    %p89 = scmp.eq.s32.totalorder %s21, 0
    %p90 = por %p88, %p89
    %s92 = sadd.s32 %s91, 1
    %p95 = scmp.eq.s32.totalorder %s15, 1
    %p96 = scmp.ne.s32.totalorder %s91, %s93
    %p97 = scmp.eq.s32.totalorder %s15, 0
    %p98 = por %p96, %p97
    %p99 = scmp.ne.s32.totalorder %s91, %s93
    %p100 = scmp.eq.s32.totalorder %s20, 1
    %p101 = por %p99, %p100
    %p102 = scmp.ne.s32.totalorder %s93, %s94
    %p103 = scmp.eq.s32.totalorder %s20, 0
    %p104 = por %p102, %p103
    %p105 = scmp.ne.s32.totalorder %s93, %s94
    %p106 = scmp.eq.s32.totalorder %s21, 1
    %p107 = por %p105, %p106
    %p109 = scmp.ne.s32.totalorder %s94, %s108
    %p110 = scmp.eq.s32.totalorder %s21, 0
    %p111 = por %p109, %p110
    %s113 = sadd.s32 %s112, 1
    %p116 = scmp.eq.s32.totalorder %s15, 1
    %p117 = scmp.ne.s32.totalorder %s112, %s114
    %p118 = scmp.eq.s32.totalorder %s15, 0
    %p119 = por %p117, %p118
    %p120 = scmp.ne.s32.totalorder %s112, %s114
    %p121 = scmp.eq.s32.totalorder %s20, 1
    %p122 = por %p120, %p121
    %p123 = scmp.ne.s32.totalorder %s114, %s115
    %p124 = scmp.eq.s32.totalorder %s20, 0
    %p125 = por %p123, %p124
    %p126 = scmp.ne.s32.totalorder %s114, %s115
    %p127 = scmp.eq.s32.totalorder %s21, 1
    %p128 = por %p126, %p127
    %p130 = scmp.ne.s32.totalorder %s115, %s129
    %p131 = scmp.eq.s32.totalorder %s21, 0
    %p132 = por %p130, %p131
    %s134 = sadd.s32 %s133, 1
    %p137 = scmp.eq.s32.totalorder %s15, 1
    %p138 = scmp.ne.s32.totalorder %s133, %s135
    %p139 = scmp.eq.s32.totalorder %s15, 0
    %p140 = por %p138, %p139
    %p141 = scmp.ne.s32.totalorder %s133, %s135
    %p142 = scmp.eq.s32.totalorder %s20, 1
    %p143 = por %p141, %p142
    %p144 = scmp.ne.s32.totalorder %s135, %s136
    %p145 = scmp.eq.s32.totalorder %s20, 0
    %p146 = por %p144, %p145
    %p147 = scmp.ne.s32.totalorder %s135, %s136
    %p148 = scmp.eq.s32.totalorder %s21, 1
    %p149 = por %p147, %p148
    %p151 = scmp.ne.s32.totalorder %s136, %s150
    %p152 = scmp.eq.s32.totalorder %s21, 0
    %p153 = por %p151, %p152
    %s155 = sadd.s32 %s154, 1
    %p158 = scmp.eq.s32.totalorder %s15, 1
    %p159 = scmp.ne.s32.totalorder %s154, %s156
    %p160 = scmp.eq.s32.totalorder %s15, 0
    %p161 = por %p159, %p160
    %p162 = scmp.ne.s32.totalorder %s154, %s156
    %p163 = scmp.eq.s32.totalorder %s20, 1
    %p164 = por %p162, %p163
    %p165 = scmp.ne.s32.totalorder %s156, %s157
    %p166 = scmp.eq.s32.totalorder %s20, 0
    %p167 = por %p165, %p166
    %p168 = scmp.ne.s32.totalorder %s156, %s157
    %p169 = scmp.eq.s32.totalorder %s21, 1
    %p170 = por %p168, %p169
    %p172 = scmp.ne.s32.totalorder %s157, %s171
    %p173 = scmp.eq.s32.totalorder %s21, 0
    %p174 = por %p172, %p173
    %s176 = sadd.s32 %s175, 1
    %p179 = scmp.eq.s32.totalorder %s15, 1
    %p180 = scmp.ne.s32.totalorder %s175, %s177
    %p181 = scmp.eq.s32.totalorder %s15, 0
    %p182 = por %p180, %p181
    %p183 = scmp.ne.s32.totalorder %s175, %s177
    %p184 = scmp.eq.s32.totalorder %s20, 1
    %p185 = por %p183, %p184
    %p186 = scmp.ne.s32.totalorder %s177, %s178
    %p187 = scmp.eq.s32.totalorder %s20, 0
    %p188 = por %p186, %p187
    %p189 = scmp.ne.s32.totalorder %s177, %s178
    %p190 = scmp.eq.s32.totalorder %s21, 1
    %p191 = por %p189, %p190
    %p193 = scmp.ne.s32.totalorder %s178, %s192
    %p194 = scmp.eq.s32.totalorder %s21, 0
    %p195 = por %p193, %p194
    %s197 = sadd.s32 %s196, 1
    %p200 = scmp.eq.s32.totalorder %s15, 1
    %p201 = scmp.ne.s32.totalorder %s196, %s198
    %p202 = scmp.eq.s32.totalorder %s15, 0
    %p203 = por %p201, %p202
    %p204 = scmp.ne.s32.totalorder %s196, %s198
    %p205 = scmp.eq.s32.totalorder %s20, 1
    %p206 = por %p204, %p205
    %p207 = scmp.ne.s32.totalorder %s198, %s199
    %p208 = scmp.eq.s32.totalorder %s20, 0
    %p209 = por %p207, %p208
    %p210 = scmp.ne.s32.totalorder %s198, %s199
    %p211 = scmp.eq.s32.totalorder %s21, 1
    %p212 = por %p210, %p211
    %p214 = scmp.ne.s32.totalorder %s199, %s213
    %p215 = scmp.eq.s32.totalorder %s21, 0
    %p216 = por %p214, %p215
    %s217 = ssub.s32 %s15, %s22
    %p218 = scmp.eq.s32.totalorder %s217, 0
    %s220 = sadd.s32 %s219, 1
    %s221 = scalar_select %p218, %s219, %s220
    %p224 = pneg %p218
    %p225 = scmp.eq.s32.totalorder %s15, 1
    %p226 = por %p224, %p225
    %p227 = scmp.ne.s32.totalorder %s219, %s222
    %p228 = scmp.eq.s32.totalorder %s15, 0
    %p229 = por %p227, %p228
    %p230 = scmp.ne.s32.totalorder %s219, %s222
    %p231 = scmp.eq.s32.totalorder %s20, 1
    %p232 = por %p230, %p231
    %p233 = scmp.ne.s32.totalorder %s222, %s223
    %p234 = scmp.eq.s32.totalorder %s20, 0
    %p235 = por %p233, %p234
    %p236 = scmp.ne.s32.totalorder %s222, %s223
    %p237 = scmp.eq.s32.totalorder %s21, 1
    %p238 = por %p236, %p237
    %p240 = scmp.ne.s32.totalorder %s223, %s239
    %p241 = scmp.eq.s32.totalorder %s21, 0
    %p242 = por %p240, %p241
    %p243 = scmp.le.s32.totalorder 1, %s15
    %p244 = scmp.lt.s32.totalorder %s15, 3
    %p245 = pnand %p243, %p244
    %p246 = pneg %p245
    // Predicated region
    $region9: #{tpu_custom_call.1} parent=5 // pred_check
      _
    $region10: #{tpu_custom_call.1} parent=5 // pred_check_branch
      %248 = sbr.rel (%p245) target = $region12
    $region11: #{tpu_custom_call.1} parent=5 // pred_region
      %s249 = ssub.s32 %s15, 1
      // Predicated region
      $region13: #{tpu_custom_call.1} parent=11 // pred_check
        %p250 = pneg %p62
      $region14: #{tpu_custom_call.1} parent=11 // pred_check_branch
        %252 = sbr.rel (%p250) target = $region16
      $region15: #{tpu_custom_call.1} parent=11 // pred_region
        _
      $region16: #{tpu_custom_call.1} parent=11 // pred_fallthru
        _
      // Predicated region
      $region17: #{tpu_custom_call.1} parent=11 // pred_check
        %p253 = pneg %p83
      $region18: #{tpu_custom_call.1} parent=11 // pred_check_branch
        %255 = sbr.rel (%p253) target = $region20
      $region19: #{tpu_custom_call.1} parent=11 // pred_region
        _
      $region20: #{tpu_custom_call.1} parent=11 // pred_fallthru
        _
      // Predicated region
      $region21: #{tpu_custom_call.1} parent=11 // pred_check
        %p256 = pneg %p104
      $region22: #{tpu_custom_call.1} parent=11 // pred_check_branch
        %258 = sbr.rel (%p256) target = $region24
      $region23: #{tpu_custom_call.1} parent=11 // pred_region
        _
      $region24: #{tpu_custom_call.1} parent=11 // pred_fallthru
        _
      // Predicated region
      $region25: #{tpu_custom_call.1} parent=11 // pred_check
        %p259 = pneg %p125
      $region26: #{tpu_custom_call.1} parent=11 // pred_check_branch
        %261 = sbr.rel (%p259) target = $region28
      $region27: #{tpu_custom_call.1} parent=11 // pred_region
        _
      $region28: #{tpu_custom_call.1} parent=11 // pred_fallthru
        _
      // Predicated region
      $region29: #{tpu_custom_call.1} parent=11 // pred_check
        %p262 = pneg %p146
      $region30: #{tpu_custom_call.1} parent=11 // pred_check_branch
        %264 = sbr.rel (%p262) target = $region32
      $region31: #{tpu_custom_call.1} parent=11 // pred_region
        _
      $region32: #{tpu_custom_call.1} parent=11 // pred_fallthru
        _
      // Predicated region
      $region33: #{tpu_custom_call.1} parent=11 // pred_check
        %p265 = pneg %p167
      $region34: #{tpu_custom_call.1} parent=11 // pred_check_branch
        %267 = sbr.rel (%p265) target = $region36
      $region35: #{tpu_custom_call.1} parent=11 // pred_region
        _
      $region36: #{tpu_custom_call.1} parent=11 // pred_fallthru
        _
      // Predicated region
      $region37: #{tpu_custom_call.1} parent=11 // pred_check
        %p268 = pneg %p188
      $region38: #{tpu_custom_call.1} parent=11 // pred_check_branch
        %270 = sbr.rel (%p268) target = $region40
      $region39: #{tpu_custom_call.1} parent=11 // pred_region
        _
      $region40: #{tpu_custom_call.1} parent=11 // pred_fallthru
        _
      // Predicated region
      $region41: #{tpu_custom_call.1} parent=11 // pred_check
        %p271 = pneg %p209
      $region42: #{tpu_custom_call.1} parent=11 // pred_check_branch
        %273 = sbr.rel (%p271) target = $region44
      $region43: #{tpu_custom_call.1} parent=11 // pred_region
        _
      $region44: #{tpu_custom_call.1} parent=11 // pred_fallthru
        _
    $region12: #{tpu_custom_call.1} parent=5 // pred_fallthru
      _
    %p274 = scmp.lt.s32.totalorder %s15, 2
    // Predicated region
    $region45: #{tpu_custom_call.1} parent=5 // pred_check
      %p275 = pneg %p274
    $region46: #{tpu_custom_call.1} parent=5 // pred_check_branch
      %277 = sbr.rel (%p275) target = $region48
    $region47: #{tpu_custom_call.1} parent=5 // pred_region
      // Predicated region
      $region49: #{tpu_custom_call.1} parent=47 // pred_check
        %p278 = pneg %p35
      $region50: #{tpu_custom_call.1} parent=47 // pred_check_branch
        %280 = sbr.rel (%p278) target = $region52
      $region51: #{tpu_custom_call.1} parent=47 // pred_region
        %s281 = smul.u32 16, %s15
        %p282 = scmp.lt.s32.totalorder %s281, 31
        %s283 = scalar_select %p282, %s281, 31
        %s284 = smul.addr %s283, 8
        %s285 = scalar_lea.vmem %s0, %s284
        %s286 = smul.u32 16, %s15
      $region52: #{tpu_custom_call.1} parent=47 // pred_fallthru
        _
    $region48: #{tpu_custom_call.1} parent=5 // pred_fallthru
      _
    %p287 = scmp.le.s32.totalorder 1, %s15
    %p288 = scmp.lt.s32.totalorder %s15, 3
    %p289 = pnand %p287, %p288
    %p290 = pneg %p289
    // Predicated region
    $region53: #{tpu_custom_call.1} parent=5 // pred_check
      _
    $region54: #{tpu_custom_call.1} parent=5 // pred_check_branch
      %292 = sbr.rel (%p289) target = $region56
    $region55: #{tpu_custom_call.1} parent=5 // pred_region
      %s293 = ssub.s32 %s15, 1
      %s294 = smul.u32 16, %s20
      %p295 = scmp.lt.s32.totalorder %s294, 31
      %s296 = scalar_select %p295, %s294, 31
      %s297 = smul.addr %s296, 8
      %s298 = scalar_lea.vmem %s0, %s297
      %p299 = pneg %p41
      %p300 = pneg %p38
      %p301 = pneg %p62
      %p302 = pneg %p59
      %p303 = pneg %p83
      %p304 = pneg %p80
      %p305 = pneg %p104
      %p306 = pneg %p101
      %p307 = pneg %p125
      %p308 = pneg %p122
      %p309 = pneg %p146
      %p310 = pneg %p143
      %p311 = pneg %p167
      %p312 = pneg %p164
      %p313 = pneg %p188
      %p314 = pneg %p185
      %p315 = pneg %p209
      %p316 = pneg %p206
      %p317 = pneg %p235
      %p318 = pneg %p232
      %s319 = smul.u32 16, %s20
      %p320 = scmp.lt.s32.totalorder %s319, 31
      %s321 = scalar_select %p320, %s319, 31
      %s322 = smul.addr %s321, 8
      %s323 = scalar_lea.vmem %s9, %s322
      %s324 = smul.u32 16, %s20
      %p325 = scmp.lt.s32.totalorder %s324, 31
      %s326 = scalar_select %p325, %s324, 31
      %s327 = smul.addr %s326, 8
      %s328 = scalar_lea.vmem %s0, %s327
      %s329 = smul.u32 16, %s20
      %s330 = smul.u32 16, %s20
      %p331 = scmp.lt.s32.totalorder %s330, 31
      %s332 = scalar_select %p331, %s330, 31
      %s333 = smul.addr %s332, 8
      %s334 = scalar_lea.vmem %s9, %s333
      %s335 = smul.u32 16, %s20
      %v336 = vld [vmem:[%s328] sm:$0xff]
      %v337 = vld [vmem:[%s328 + $0x8] sm:$0xff]
      %v338 = vld [vmem:[%s328 + $0x10] sm:$0xff]
      %v339 = vld [vmem:[%s328 + $0x18] sm:$0xff]
      %v340 = vld [vmem:[%s328 + $0x20] sm:$0xff]
      %v341 = vld [vmem:[%s328 + $0x28] sm:$0xff]
      %v342 = vld [vmem:[%s328 + $0x30] sm:$0xff]
      %v343 = vld [vmem:[%s328 + $0x38] sm:$0xff]
      %v344 = vld [vmem:[%s328 + $0x40] sm:$0xff]
      %v345 = vld [vmem:[%s328 + $0x48] sm:$0xff]
      %v346 = vld [vmem:[%s328 + $0x50] sm:$0xff]
      %v347 = vld [vmem:[%s328 + $0x58] sm:$0xff]
      %v348 = vld [vmem:[%s328 + $0x60] sm:$0xff]
      %v349 = vld [vmem:[%s328 + $0x68] sm:$0xff]
      %v350 = vld [vmem:[%s328 + $0x70] sm:$0xff]
      %v351 = vld [vmem:[%s328 + $0x78] sm:$0xff]
      %v352 = vld [vmem:[%s1] sm:$0xff]
      %v353 = vld [vmem:[%s1 + $0x8] sm:$0xff]
      %v354 = vld [vmem:[%s2] sm:$0x1]
      %v356 = vlaneseq
      %v357 = vshrl.u32 %v356, 7
      %v358 = vsub.s32 0, %v357
      %v359 = vrot.slane %v354, %v358
      %vm361 = vcmask 130048
      %v363 = vsel %vm361, %v336, 0
      %v366 = vsel %vm361, %v337, 0
      %v369 = vsel %vm361, %v338, 0
      %v372 = vsel %vm361, %v339, 0
      %v375 = vsel %vm361, %v340, 0
      %v378 = vsel %vm361, %v341, 0
      %v381 = vsel %vm361, %v342, 0
      %v384 = vsel %vm361, %v343, 0
      %v387 = vsel %vm361, %v344, 0
      %v390 = vsel %vm361, %v345, 0
      %v393 = vsel %vm361, %v346, 0
      %v396 = vsel %vm361, %v347, 0
      %v399 = vsel %vm361, %v348, 0
      %v402 = vsel %vm361, %v349, 0
      %v405 = vsel %vm361, %v350, 0
      %v408 = vsel %vm361, %v351, 0
      %410 = vmatprep.subr.mxu0 0.0
      %411 = vmatpush1.msra.mxu0 %v352
      %412 = vmatprep.subr.mxu0 0.0
      %413 = vmatpush1.msra.mxu0 %v353
      %414 = vmatprep.subr.mxu0 0.0
      %415 = vmatpush1.msra.mxu0 0.0
      %416 = vmatprep.subr.mxu0 0.0
      %417 = vmatpush1.msra.mxu0 0.0
      %418 = vmatprep.subr.mxu0 0.0
      %419 = vmatpush1.msra.mxu0 0.0
      %420 = vmatprep.subr.mxu0 0.0
      %421 = vmatpush1.msra.mxu0 0.0
      %422 = vmatprep.subr.mxu0 0.0
      %423 = vmatpush1.msra.mxu0 0.0
      %424 = vmatprep.subr.mxu0 0.0
      %425 = vmatpush1.msra.mxu0 0.0
      %426 = vmatprep.subr.mxu0 0.0
      %427 = vmatpush1.msra.mxu0 0.0
      %428 = vmatprep.subr.mxu0 0.0
      %429 = vmatpush1.msra.mxu0 0.0
      %430 = vmatprep.subr.mxu0 0.0
      %431 = vmatpush1.msra.mxu0 0.0
      %432 = vmatprep.subr.mxu0 0.0
      %433 = vmatpush1.msra.mxu0 0.0
      %434 = vmatprep.subr.mxu0 0.0
      %435 = vmatpush1.msra.mxu0 0.0
      %436 = vmatprep.subr.mxu0 0.0
      %437 = vmatpush1.msra.mxu0 0.0
      %438 = vmatprep.subr.mxu0 0.0
      %439 = vmatpush1.msra.mxu0 0.0
      %440 = vmatprep.subr.mxu0 0.0
      %441 = vmatpush1.msra.mxu0 0.0
      %442 = vmatprep.subr.mxu0 0.0
      %443 = vmatpush1.msra.mxu0 0.0
      %444 = vmatprep.subr.mxu0 0.0
      %445 = vmatpush1.msra.mxu0 0.0
      %446 = vmatprep.subr.mxu0 0.0
      %447 = vmatpush1.msra.mxu0 0.0
      %448 = vmatprep.subr.mxu0 0.0
      %449 = vmatpush1.msra.mxu0 0.0
      %450 = vmatprep.subr.mxu0 0.0
      %451 = vmatpush1.msra.mxu0 0.0
      %452 = vmatprep.subr.mxu0 0.0
      %453 = vmatpush1.msra.mxu0 0.0
      %454 = vmatprep.subr.mxu0 0.0
      %455 = vmatpush1.msra.mxu0 0.0
      %456 = vmatprep.subr.mxu0 0.0
      %457 = vmatpush1.msra.mxu0 0.0
      %458 = vmatprep.subr.mxu0 0.0
      %459 = vmatpush1.msra.mxu0 0.0
      %460 = vmatprep.subr.mxu0 0.0
      %461 = vmatpush1.msra.mxu0 0.0
      %462 = vmatprep.subr.mxu0 0.0
      %463 = vmatpush1.msra.mxu0 0.0
      %464 = vmatprep.subr.mxu0 0.0
      %465 = vmatpush1.msra.mxu0 0.0
      %466 = vmatprep.subr.mxu0 0.0
      %467 = vmatpush1.msra.mxu0 0.0
      %468 = vmatprep.subr.mxu0 0.0
      %469 = vmatpush1.msra.mxu0 0.0
      %470 = vmatprep.subr.mxu0 0.0
      %471 = vmatpush1.msra.mxu0 0.0
      %472 = vmatprep.subr.mxu0 0.0
      %473 = vmatpush1.msra.mxu0 0.0
      %474 = vmatprep.mubr.f32.mxu0 0.0
      %475 = vmatmul.mubr.f32.gmra.mrb[0].mxu0 %v363
      %v476 = vpop.f32.mrb[0].mxu0
      %v477 = vadd.f32 %v359, %v476
      %v478 = vpop.f32.mrb[0].mxu0
      %479 = vmatprep.mubr.f32.mxu0 0.0
      %480 = vmatmul.mubr.f32.gmra.mrb[0].mxu0 %v366
      %v481 = vpop.f32.mrb[0].mxu0
      %v482 = vadd.f32 %v359, %v481
      %v483 = vpop.f32.mrb[0].mxu0
      %484 = vmatprep.mubr.f32.mxu0 0.0
      %485 = vmatmul.mubr.f32.gmra.mrb[0].mxu0 %v369
      %v486 = vpop.f32.mrb[0].mxu0
      %v487 = vadd.f32 %v359, %v486
      %v488 = vpop.f32.mrb[0].mxu0
      %489 = vmatprep.mubr.f32.mxu0 0.0
      %490 = vmatmul.mubr.f32.gmra.mrb[0].mxu0 %v372
      %v491 = vpop.f32.mrb[0].mxu0
      %v492 = vadd.f32 %v359, %v491
      %v493 = vpop.f32.mrb[0].mxu0
      %494 = vmatprep.mubr.f32.mxu0 0.0
      %495 = vmatmul.mubr.f32.gmra.mrb[0].mxu0 %v375
      %v496 = vpop.f32.mrb[0].mxu0
      %v497 = vadd.f32 %v359, %v496
      %v498 = vpop.f32.mrb[0].mxu0
      %499 = vmatprep.mubr.f32.mxu0 0.0
      %500 = vmatmul.mubr.f32.gmra.mrb[0].mxu0 %v378
      %v501 = vpop.f32.mrb[0].mxu0
      %v502 = vadd.f32 %v359, %v501
      %v503 = vpop.f32.mrb[0].mxu0
      %504 = vmatprep.mubr.f32.mxu0 0.0
      %505 = vmatmul.mubr.f32.gmra.mrb[0].mxu0 %v381
      %v506 = vpop.f32.mrb[0].mxu0
      %v507 = vadd.f32 %v359, %v506
      %v508 = vpop.f32.mrb[0].mxu0
      %509 = vmatprep.mubr.f32.mxu0 0.0
      %510 = vmatmul.mubr.f32.gmra.mrb[0].mxu0 %v384
      %v511 = vpop.f32.mrb[0].mxu0
      %v512 = vadd.f32 %v359, %v511
      %v513 = vpop.f32.mrb[0].mxu0
      %514 = vmatprep.mubr.f32.mxu0 0.0
      %515 = vmatmul.mubr.f32.gmra.mrb[0].mxu0 %v387
      %v516 = vpop.f32.mrb[0].mxu0
      %v517 = vadd.f32 %v359, %v516
      %v518 = vpop.f32.mrb[0].mxu0
      %519 = vmatprep.mubr.f32.mxu0 0.0
      %520 = vmatmul.mubr.f32.gmra.mrb[0].mxu0 %v390
      %v521 = vpop.f32.mrb[0].mxu0
      %v522 = vadd.f32 %v359, %v521
      %v523 = vpop.f32.mrb[0].mxu0
      %524 = vmatprep.mubr.f32.mxu0 0.0
      %525 = vmatmul.mubr.f32.gmra.mrb[0].mxu0 %v393
      %v526 = vpop.f32.mrb[0].mxu0
      %v527 = vadd.f32 %v359, %v526
      %v528 = vpop.f32.mrb[0].mxu0
      %529 = vmatprep.mubr.f32.mxu0 0.0
      %530 = vmatmul.mubr.f32.gmra.mrb[0].mxu0 %v396
      %v531 = vpop.f32.mrb[0].mxu0
      %v532 = vadd.f32 %v359, %v531
      %v533 = vpop.f32.mrb[0].mxu0
      %534 = vmatprep.mubr.f32.mxu0 0.0
      %535 = vmatmul.mubr.f32.gmra.mrb[0].mxu0 %v399
      %v536 = vpop.f32.mrb[0].mxu0
      %v537 = vadd.f32 %v359, %v536
      %v538 = vpop.f32.mrb[0].mxu0
      %539 = vmatprep.mubr.f32.mxu0 0.0
      %540 = vmatmul.mubr.f32.gmra.mrb[0].mxu0 %v402
      %v541 = vpop.f32.mrb[0].mxu0
      %v542 = vadd.f32 %v359, %v541
      %v543 = vpop.f32.mrb[0].mxu0
      %544 = vmatprep.mubr.f32.mxu0 0.0
      %545 = vmatmul.mubr.f32.gmra.mrb[0].mxu0 %v405
      %v546 = vpop.f32.mrb[0].mxu0
      %v547 = vadd.f32 %v359, %v546
      %v548 = vpop.f32.mrb[0].mxu0
      %549 = vmatprep.mubr.f32.mxu0 0.0
      %550 = vmatmul.mubr.f32.gmra.mrb[0].mxu0 %v408
      %v551 = vpop.f32.mrb[0].mxu0
      %v552 = vadd.f32 %v359, %v551
      %v553 = vpop.f32.mrb[0].mxu0
      %554 = vdwg.mxu0
      %v555 = vmax.f32 %v477, 0.0
      %v556 = vmax.f32 %v482, 0.0
      %v557 = vmax.f32 %v487, 0.0
      %v558 = vmax.f32 %v492, 0.0
      %v559 = vmax.f32 %v497, 0.0
      %v560 = vmax.f32 %v502, 0.0
      %v561 = vmax.f32 %v507, 0.0
      %v562 = vmax.f32 %v512, 0.0
      %v563 = vmax.f32 %v517, 0.0
      %v564 = vmax.f32 %v522, 0.0
      %v565 = vmax.f32 %v527, 0.0
      %v566 = vmax.f32 %v532, 0.0
      %v567 = vmax.f32 %v537, 0.0
      %v568 = vmax.f32 %v542, 0.0
      %v569 = vmax.f32 %v547, 0.0
      %v570 = vmax.f32 %v552, 0.0
      %v571 = vld [vmem:[%s3] sm:$0xff]
      %v572 = vld [vmem:[%s3 + $0x8] sm:$0xff]
      %v573 = vld [vmem:[%s3 + $0x10] sm:$0xff]
      %v574 = vld [vmem:[%s3 + $0x18] sm:$0xff]
      %v575 = vld [vmem:[%s4] sm:$0x1]
      %v577 = vlaneseq
      %v578 = vshrl.u32 %v577, 7
      %v579 = vsub.s32 0, %v578
      %v580 = vrot.slane %v575, %v579
      %vm582 = vcmask 261120
      %v584 = vsel %vm582, %v555, 0
      %v587 = vsel %vm582, %v556, 0
      %v590 = vsel %vm582, %v557, 0
      %v593 = vsel %vm582, %v558, 0
      %v596 = vsel %vm582, %v559, 0
      %v599 = vsel %vm582, %v560, 0
      %v602 = vsel %vm582, %v561, 0
      %v605 = vsel %vm582, %v562, 0
      %v608 = vsel %vm582, %v563, 0
      %v611 = vsel %vm582, %v564, 0
      %v614 = vsel %vm582, %v565, 0
      %v617 = vsel %vm582, %v566, 0
      %v620 = vsel %vm582, %v567, 0
      %v623 = vsel %vm582, %v568, 0
      %v626 = vsel %vm582, %v569, 0
      %v629 = vsel %vm582, %v570, 0
      %631 = vmatprep.subr.mxu0 0.0
      %632 = vmatpush1.msra.mxu0 %v571
      %633 = vmatprep.subr.mxu0 0.0
      %634 = vmatpush1.msra.mxu0 %v572
      %635 = vmatprep.subr.mxu0 0.0
      %636 = vmatpush1.msra.mxu0 %v573
      %637 = vmatprep.subr.mxu0 0.0
      %638 = vmatpush1.msra.mxu0 %v574
      %639 = vmatprep.subr.mxu0 0.0
      %640 = vmatpush1.msra.mxu0 0.0
      %641 = vmatprep.subr.mxu0 0.0
      %642 = vmatpush1.msra.mxu0 0.0
      %643 = vmatprep.subr.mxu0 0.0
      %644 = vmatpush1.msra.mxu0 0.0
      %645 = vmatprep.subr.mxu0 0.0
      %646 = vmatpush1.msra.mxu0 0.0
      %647 = vmatprep.subr.mxu0 0.0
      %648 = vmatpush1.msra.mxu0 0.0
      %649 = vmatprep.subr.mxu0 0.0
      %650 = vmatpush1.msra.mxu0 0.0
      %651 = vmatprep.subr.mxu0 0.0
      %652 = vmatpush1.msra.mxu0 0.0
      %653 = vmatprep.subr.mxu0 0.0
      %654 = vmatpush1.msra.mxu0 0.0
      %655 = vmatprep.subr.mxu0 0.0
      %656 = vmatpush1.msra.mxu0 0.0
      %657 = vmatprep.subr.mxu0 0.0
      %658 = vmatpush1.msra.mxu0 0.0
      %659 = vmatprep.subr.mxu0 0.0
      %660 = vmatpush1.msra.mxu0 0.0
      %661 = vmatprep.subr.mxu0 0.0
      %662 = vmatpush1.msra.mxu0 0.0
      %663 = vmatprep.subr.mxu0 0.0
      %664 = vmatpush1.msra.mxu0 0.0
      %665 = vmatprep.subr.mxu0 0.0
      %666 = vmatpush1.msra.mxu0 0.0
      %667 = vmatprep.subr.mxu0 0.0
      %668 = vmatpush1.msra.mxu0 0.0
      %669 = vmatprep.subr.mxu0 0.0
      %670 = vmatpush1.msra.mxu0 0.0
      %671 = vmatprep.subr.mxu0 0.0
      %672 = vmatpush1.msra.mxu0 0.0
      %673 = vmatprep.subr.mxu0 0.0
      %674 = vmatpush1.msra.mxu0 0.0
      %675 = vmatprep.subr.mxu0 0.0
      %676 = vmatpush1.msra.mxu0 0.0
      %677 = vmatprep.subr.mxu0 0.0
      %678 = vmatpush1.msra.mxu0 0.0
      %679 = vmatprep.subr.mxu0 0.0
      %680 = vmatpush1.msra.mxu0 0.0
      %681 = vmatprep.subr.mxu0 0.0
      %682 = vmatpush1.msra.mxu0 0.0
      %683 = vmatprep.subr.mxu0 0.0
      %684 = vmatpush1.msra.mxu0 0.0
      %685 = vmatprep.subr.mxu0 0.0
      %686 = vmatpush1.msra.mxu0 0.0
      %687 = vmatprep.subr.mxu0 0.0
      %688 = vmatpush1.msra.mxu0 0.0
      %689 = vmatprep.subr.mxu0 0.0
      %690 = vmatpush1.msra.mxu0 0.0
      %691 = vmatprep.subr.mxu0 0.0
      %692 = vmatpush1.msra.mxu0 0.0
      %693 = vmatprep.subr.mxu0 0.0
      %694 = vmatpush1.msra.mxu0 0.0
      %695 = vmatprep.mubr.f32.mxu0 0.0
      %696 = vmatmul.mubr.f32.gmra.mrb[0].mxu0 %v584
      %v697 = vpop.f32.mrb[0].mxu0
      %v698 = vadd.f32 %v580, %v697
      %v699 = vpop.f32.mrb[0].mxu0
      %700 = vmatprep.mubr.f32.mxu0 0.0
      %701 = vmatmul.mubr.f32.gmra.mrb[0].mxu0 %v587
      %v702 = vpop.f32.mrb[0].mxu0
      %v703 = vadd.f32 %v580, %v702
      %v704 = vpop.f32.mrb[0].mxu0
      %705 = vmatprep.mubr.f32.mxu0 0.0
      %706 = vmatmul.mubr.f32.gmra.mrb[0].mxu0 %v590
      %v707 = vpop.f32.mrb[0].mxu0
      %v708 = vadd.f32 %v580, %v707
      %v709 = vpop.f32.mrb[0].mxu0
      %710 = vmatprep.mubr.f32.mxu0 0.0
      %711 = vmatmul.mubr.f32.gmra.mrb[0].mxu0 %v593
      %v712 = vpop.f32.mrb[0].mxu0
      %v713 = vadd.f32 %v580, %v712
      %v714 = vpop.f32.mrb[0].mxu0
      %715 = vmatprep.mubr.f32.mxu0 0.0
      %716 = vmatmul.mubr.f32.gmra.mrb[0].mxu0 %v596
      %v717 = vpop.f32.mrb[0].mxu0
      %v718 = vadd.f32 %v580, %v717
      %v719 = vpop.f32.mrb[0].mxu0
      %720 = vmatprep.mubr.f32.mxu0 0.0
      %721 = vmatmul.mubr.f32.gmra.mrb[0].mxu0 %v599
      %v722 = vpop.f32.mrb[0].mxu0
      %v723 = vadd.f32 %v580, %v722
      %v724 = vpop.f32.mrb[0].mxu0
      %725 = vmatprep.mubr.f32.mxu0 0.0
      %726 = vmatmul.mubr.f32.gmra.mrb[0].mxu0 %v602
      %v727 = vpop.f32.mrb[0].mxu0
      %v728 = vadd.f32 %v580, %v727
      %v729 = vpop.f32.mrb[0].mxu0
      %730 = vmatprep.mubr.f32.mxu0 0.0
      %731 = vmatmul.mubr.f32.gmra.mrb[0].mxu0 %v605
      %v732 = vpop.f32.mrb[0].mxu0
      %v733 = vadd.f32 %v580, %v732
      %v734 = vpop.f32.mrb[0].mxu0
      %735 = vmatprep.mubr.f32.mxu0 0.0
      %736 = vmatmul.mubr.f32.gmra.mrb[0].mxu0 %v608
      %v737 = vpop.f32.mrb[0].mxu0
      %v738 = vadd.f32 %v580, %v737
      %v739 = vpop.f32.mrb[0].mxu0
      %740 = vmatprep.mubr.f32.mxu0 0.0
      %741 = vmatmul.mubr.f32.gmra.mrb[0].mxu0 %v611
      %v742 = vpop.f32.mrb[0].mxu0
      %v743 = vadd.f32 %v580, %v742
      %v744 = vpop.f32.mrb[0].mxu0
      %745 = vmatprep.mubr.f32.mxu0 0.0
      %746 = vmatmul.mubr.f32.gmra.mrb[0].mxu0 %v614
      %v747 = vpop.f32.mrb[0].mxu0
      %v748 = vadd.f32 %v580, %v747
      %v749 = vpop.f32.mrb[0].mxu0
      %750 = vmatprep.mubr.f32.mxu0 0.0
      %751 = vmatmul.mubr.f32.gmra.mrb[0].mxu0 %v617
      %v752 = vpop.f32.mrb[0].mxu0
      %v753 = vadd.f32 %v580, %v752
      %v754 = vpop.f32.mrb[0].mxu0
      %755 = vmatprep.mubr.f32.mxu0 0.0
      %756 = vmatmul.mubr.f32.gmra.mrb[0].mxu0 %v620
      %v757 = vpop.f32.mrb[0].mxu0
      %v758 = vadd.f32 %v580, %v757
      %v759 = vpop.f32.mrb[0].mxu0
      %760 = vmatprep.mubr.f32.mxu0 0.0
      %761 = vmatmul.mubr.f32.gmra.mrb[0].mxu0 %v623
      %v762 = vpop.f32.mrb[0].mxu0
      %v763 = vadd.f32 %v580, %v762
      %v764 = vpop.f32.mrb[0].mxu0
      %765 = vmatprep.mubr.f32.mxu0 0.0
      %766 = vmatmul.mubr.f32.gmra.mrb[0].mxu0 %v626
      %v767 = vpop.f32.mrb[0].mxu0
      %v768 = vadd.f32 %v580, %v767
      %v769 = vpop.f32.mrb[0].mxu0
      %770 = vmatprep.mubr.f32.mxu0 0.0
      %771 = vmatmul.mubr.f32.gmra.mrb[0].mxu0 %v629
      %v772 = vpop.f32.mrb[0].mxu0
      %v773 = vadd.f32 %v580, %v772
      %v774 = vpop.f32.mrb[0].mxu0
      %775 = vdwg.mxu0
      %v776 = vmax.f32 %v698, 0.0
      %v777 = vmax.f32 %v703, 0.0
      %v778 = vmax.f32 %v708, 0.0
      %v779 = vmax.f32 %v713, 0.0
      %v780 = vmax.f32 %v718, 0.0
      %v781 = vmax.f32 %v723, 0.0
      %v782 = vmax.f32 %v728, 0.0
      %v783 = vmax.f32 %v733, 0.0
      %v784 = vmax.f32 %v738, 0.0
      %v785 = vmax.f32 %v743, 0.0
      %v786 = vmax.f32 %v748, 0.0
      %v787 = vmax.f32 %v753, 0.0
      %v788 = vmax.f32 %v758, 0.0
      %v789 = vmax.f32 %v763, 0.0
      %v790 = vmax.f32 %v768, 0.0
      %v791 = vmax.f32 %v773, 0.0
      %v792 = vld [vmem:[%s5] sm:$0xff]
      %v793 = vld [vmem:[%s5 + $0x8] sm:$0xff]
      %v794 = vld [vmem:[%s5 + $0x10] sm:$0xff]
      %v795 = vld [vmem:[%s5 + $0x18] sm:$0xff]
      %v796 = vld [vmem:[%s6] sm:$0x1]
      %v798 = vlaneseq
      %v799 = vshrl.u32 %v798, 7
      %v800 = vsub.s32 0, %v799
      %v801 = vrot.slane %v796, %v800
      %v804 = vsel %vm582, %v776, 0
      %v807 = vsel %vm582, %v777, 0
      %v810 = vsel %vm582, %v778, 0
      %v813 = vsel %vm582, %v779, 0
      %v816 = vsel %vm582, %v780, 0
      %v819 = vsel %vm582, %v781, 0
      %v822 = vsel %vm582, %v782, 0
      %v825 = vsel %vm582, %v783, 0
      %v828 = vsel %vm582, %v784, 0
      %v831 = vsel %vm582, %v785, 0
      %v834 = vsel %vm582, %v786, 0
      %v837 = vsel %vm582, %v787, 0
      %v840 = vsel %vm582, %v788, 0
      %v843 = vsel %vm582, %v789, 0
      %v846 = vsel %vm582, %v790, 0
      %v849 = vsel %vm582, %v791, 0
      %851 = vmatprep.subr.mxu0 0.0
      %852 = vmatpush1.msra.mxu0 %v792
      %853 = vmatprep.subr.mxu0 0.0
      %854 = vmatpush1.msra.mxu0 %v793
      %855 = vmatprep.subr.mxu0 0.0
      %856 = vmatpush1.msra.mxu0 %v794
      %857 = vmatprep.subr.mxu0 0.0
      %858 = vmatpush1.msra.mxu0 %v795
      %859 = vmatprep.subr.mxu0 0.0
      %860 = vmatpush1.msra.mxu0 0.0
      %861 = vmatprep.subr.mxu0 0.0
      %862 = vmatpush1.msra.mxu0 0.0
      %863 = vmatprep.subr.mxu0 0.0
      %864 = vmatpush1.msra.mxu0 0.0
      %865 = vmatprep.subr.mxu0 0.0
      %866 = vmatpush1.msra.mxu0 0.0
      %867 = vmatprep.subr.mxu0 0.0
      %868 = vmatpush1.msra.mxu0 0.0
      %869 = vmatprep.subr.mxu0 0.0
      %870 = vmatpush1.msra.mxu0 0.0
      %871 = vmatprep.subr.mxu0 0.0
      %872 = vmatpush1.msra.mxu0 0.0
      %873 = vmatprep.subr.mxu0 0.0
      %874 = vmatpush1.msra.mxu0 0.0
      %875 = vmatprep.subr.mxu0 0.0
      %876 = vmatpush1.msra.mxu0 0.0
      %877 = vmatprep.subr.mxu0 0.0
      %878 = vmatpush1.msra.mxu0 0.0
      %879 = vmatprep.subr.mxu0 0.0
      %880 = vmatpush1.msra.mxu0 0.0
      %881 = vmatprep.subr.mxu0 0.0
      %882 = vmatpush1.msra.mxu0 0.0
      %883 = vmatprep.subr.mxu0 0.0
      %884 = vmatpush1.msra.mxu0 0.0
      %885 = vmatprep.subr.mxu0 0.0
      %886 = vmatpush1.msra.mxu0 0.0
      %887 = vmatprep.subr.mxu0 0.0
      %888 = vmatpush1.msra.mxu0 0.0
      %889 = vmatprep.subr.mxu0 0.0
      %890 = vmatpush1.msra.mxu0 0.0
      %891 = vmatprep.subr.mxu0 0.0
      %892 = vmatpush1.msra.mxu0 0.0
      %893 = vmatprep.subr.mxu0 0.0
      %894 = vmatpush1.msra.mxu0 0.0
      %895 = vmatprep.subr.mxu0 0.0
      %896 = vmatpush1.msra.mxu0 0.0
      %897 = vmatprep.subr.mxu0 0.0
      %898 = vmatpush1.msra.mxu0 0.0
      %899 = vmatprep.subr.mxu0 0.0
      %900 = vmatpush1.msra.mxu0 0.0
      %901 = vmatprep.subr.mxu0 0.0
      %902 = vmatpush1.msra.mxu0 0.0
      %903 = vmatprep.subr.mxu0 0.0
      %904 = vmatpush1.msra.mxu0 0.0
      %905 = vmatprep.subr.mxu0 0.0
      %906 = vmatpush1.msra.mxu0 0.0
      %907 = vmatprep.subr.mxu0 0.0
      %908 = vmatpush1.msra.mxu0 0.0
      %909 = vmatprep.subr.mxu0 0.0
      %910 = vmatpush1.msra.mxu0 0.0
      %911 = vmatprep.subr.mxu0 0.0
      %912 = vmatpush1.msra.mxu0 0.0
      %913 = vmatprep.subr.mxu0 0.0
      %914 = vmatpush1.msra.mxu0 0.0
      %915 = vmatprep.mubr.f32.mxu0 0.0
      %916 = vmatmul.mubr.f32.gmra.mrb[0].mxu0 %v804
      %v917 = vpop.f32.mrb[0].mxu0
      %v918 = vadd.f32 %v801, %v917
      %v919 = vpop.f32.mrb[0].mxu0
      %920 = vmatprep.mubr.f32.mxu0 0.0
      %921 = vmatmul.mubr.f32.gmra.mrb[0].mxu0 %v807
      %v922 = vpop.f32.mrb[0].mxu0
      %v923 = vadd.f32 %v801, %v922
      %v924 = vpop.f32.mrb[0].mxu0
      %925 = vmatprep.mubr.f32.mxu0 0.0
      %926 = vmatmul.mubr.f32.gmra.mrb[0].mxu0 %v810
      %v927 = vpop.f32.mrb[0].mxu0
      %v928 = vadd.f32 %v801, %v927
      %v929 = vpop.f32.mrb[0].mxu0
      %930 = vmatprep.mubr.f32.mxu0 0.0
      %931 = vmatmul.mubr.f32.gmra.mrb[0].mxu0 %v813
      %v932 = vpop.f32.mrb[0].mxu0
      %v933 = vadd.f32 %v801, %v932
      %v934 = vpop.f32.mrb[0].mxu0
      %935 = vmatprep.mubr.f32.mxu0 0.0
      %936 = vmatmul.mubr.f32.gmra.mrb[0].mxu0 %v816
      %v937 = vpop.f32.mrb[0].mxu0
      %v938 = vadd.f32 %v801, %v937
      %v939 = vpop.f32.mrb[0].mxu0
      %940 = vmatprep.mubr.f32.mxu0 0.0
      %941 = vmatmul.mubr.f32.gmra.mrb[0].mxu0 %v819
      %v942 = vpop.f32.mrb[0].mxu0
      %v943 = vadd.f32 %v801, %v942
      %v944 = vpop.f32.mrb[0].mxu0
      %945 = vmatprep.mubr.f32.mxu0 0.0
      %946 = vmatmul.mubr.f32.gmra.mrb[0].mxu0 %v822
      %v947 = vpop.f32.mrb[0].mxu0
      %v948 = vadd.f32 %v801, %v947
      %v949 = vpop.f32.mrb[0].mxu0
      %950 = vmatprep.mubr.f32.mxu0 0.0
      %951 = vmatmul.mubr.f32.gmra.mrb[0].mxu0 %v825
      %v952 = vpop.f32.mrb[0].mxu0
      %v953 = vadd.f32 %v801, %v952
      %v954 = vpop.f32.mrb[0].mxu0
      %955 = vmatprep.mubr.f32.mxu0 0.0
      %956 = vmatmul.mubr.f32.gmra.mrb[0].mxu0 %v828
      %v957 = vpop.f32.mrb[0].mxu0
      %v958 = vadd.f32 %v801, %v957
      %v959 = vpop.f32.mrb[0].mxu0
      %960 = vmatprep.mubr.f32.mxu0 0.0
      %961 = vmatmul.mubr.f32.gmra.mrb[0].mxu0 %v831
      %v962 = vpop.f32.mrb[0].mxu0
      %v963 = vadd.f32 %v801, %v962
      %v964 = vpop.f32.mrb[0].mxu0
      %965 = vmatprep.mubr.f32.mxu0 0.0
      %966 = vmatmul.mubr.f32.gmra.mrb[0].mxu0 %v834
      %v967 = vpop.f32.mrb[0].mxu0
      %v968 = vadd.f32 %v801, %v967
      %v969 = vpop.f32.mrb[0].mxu0
      %970 = vmatprep.mubr.f32.mxu0 0.0
      %971 = vmatmul.mubr.f32.gmra.mrb[0].mxu0 %v837
      %v972 = vpop.f32.mrb[0].mxu0
      %v973 = vadd.f32 %v801, %v972
      %v974 = vpop.f32.mrb[0].mxu0
      %975 = vmatprep.mubr.f32.mxu0 0.0
      %976 = vmatmul.mubr.f32.gmra.mrb[0].mxu0 %v840
      %v977 = vpop.f32.mrb[0].mxu0
      %v978 = vadd.f32 %v801, %v977
      %v979 = vpop.f32.mrb[0].mxu0
      %980 = vmatprep.mubr.f32.mxu0 0.0
      %981 = vmatmul.mubr.f32.gmra.mrb[0].mxu0 %v843
      %v982 = vpop.f32.mrb[0].mxu0
      %v983 = vadd.f32 %v801, %v982
      %v984 = vpop.f32.mrb[0].mxu0
      %985 = vmatprep.mubr.f32.mxu0 0.0
      %986 = vmatmul.mubr.f32.gmra.mrb[0].mxu0 %v846
      %v987 = vpop.f32.mrb[0].mxu0
      %v988 = vadd.f32 %v801, %v987
      %v989 = vpop.f32.mrb[0].mxu0
      %990 = vmatprep.mubr.f32.mxu0 0.0
      %991 = vmatmul.mubr.f32.gmra.mrb[0].mxu0 %v849
      %v992 = vpop.f32.mrb[0].mxu0
      %v993 = vadd.f32 %v801, %v992
      %v994 = vpop.f32.mrb[0].mxu0
      %995 = vdwg.mxu0
      %v996 = vmax.f32 %v918, 0.0
      %v997 = vmax.f32 %v923, 0.0
      %v998 = vmax.f32 %v928, 0.0
      %v999 = vmax.f32 %v933, 0.0
      %v1000 = vmax.f32 %v938, 0.0
      %v1001 = vmax.f32 %v943, 0.0
      %v1002 = vmax.f32 %v948, 0.0
      %v1003 = vmax.f32 %v953, 0.0
      %v1004 = vmax.f32 %v958, 0.0
      %v1005 = vmax.f32 %v963, 0.0
      %v1006 = vmax.f32 %v968, 0.0
      %v1007 = vmax.f32 %v973, 0.0
      %v1008 = vmax.f32 %v978, 0.0
      %v1009 = vmax.f32 %v983, 0.0
      %v1010 = vmax.f32 %v988, 0.0
      %v1011 = vmax.f32 %v993, 0.0
      %v1012 = vld [vmem:[%s7] sm:$0xff]
      %v1013 = vld [vmem:[%s7 + $0x8] sm:$0xff]
      %v1014 = vld [vmem:[%s7 + $0x10] sm:$0xff]
      %v1015 = vld [vmem:[%s7 + $0x18] sm:$0xff]
      %v1016 = vld [vmem:[%s7 + $0x20] sm:$0xff]
      %v1017 = vld [vmem:[%s7 + $0x28] sm:$0xff]
      %v1018 = vld [vmem:[%s8] sm:$0x1]
      %v1020 = vlaneseq
      %v1021 = vshrl.u32 %v1020, 7
      %v1022 = vsub.s32 0, %v1021
      %v1023 = vrot.slane %v1018, %v1022
      %vm1025 = vcmask 392192
      %v1027 = vsel %vm1025, %v996, 0
      %v1030 = vsel %vm1025, %v997, 0
      %v1033 = vsel %vm1025, %v998, 0
      %v1036 = vsel %vm1025, %v999, 0
      %v1039 = vsel %vm1025, %v1000, 0
      %v1042 = vsel %vm1025, %v1001, 0
      %v1045 = vsel %vm1025, %v1002, 0
      %v1048 = vsel %vm1025, %v1003, 0
      %v1051 = vsel %vm1025, %v1004, 0
      %v1054 = vsel %vm1025, %v1005, 0
      %v1057 = vsel %vm1025, %v1006, 0
      %v1060 = vsel %vm1025, %v1007, 0
      %v1063 = vsel %vm1025, %v1008, 0
      %v1066 = vsel %vm1025, %v1009, 0
      %v1069 = vsel %vm1025, %v1010, 0
      %v1072 = vsel %vm1025, %v1011, 0
      %1074 = vmatprep.subr.mxu0 0.0
      %1075 = vmatpush1.msra.mxu0 %v1012
      %1076 = vmatprep.subr.mxu0 0.0
      %1077 = vmatpush1.msra.mxu0 %v1013
      %1078 = vmatprep.subr.mxu0 0.0
      %1079 = vmatpush1.msra.mxu0 %v1014
      %1080 = vmatprep.subr.mxu0 0.0
      %1081 = vmatpush1.msra.mxu0 %v1015
      %1082 = vmatprep.subr.mxu0 0.0
      %1083 = vmatpush1.msra.mxu0 %v1016
      %1084 = vmatprep.subr.mxu0 0.0
      %1085 = vmatpush1.msra.mxu0 %v1017
      %1086 = vmatprep.subr.mxu0 0.0
      %1087 = vmatpush1.msra.mxu0 0.0
      %1088 = vmatprep.subr.mxu0 0.0
      %1089 = vmatpush1.msra.mxu0 0.0
      %1090 = vmatprep.subr.mxu0 0.0
      %1091 = vmatpush1.msra.mxu0 0.0
      %1092 = vmatprep.subr.mxu0 0.0
      %1093 = vmatpush1.msra.mxu0 0.0
      %1094 = vmatprep.subr.mxu0 0.0
      %1095 = vmatpush1.msra.mxu0 0.0
      %1096 = vmatprep.subr.mxu0 0.0
      %1097 = vmatpush1.msra.mxu0 0.0
      %1098 = vmatprep.subr.mxu0 0.0
      %1099 = vmatpush1.msra.mxu0 0.0
      %1100 = vmatprep.subr.mxu0 0.0
      %1101 = vmatpush1.msra.mxu0 0.0
      %1102 = vmatprep.subr.mxu0 0.0
      %1103 = vmatpush1.msra.mxu0 0.0
      %1104 = vmatprep.subr.mxu0 0.0
      %1105 = vmatpush1.msra.mxu0 0.0
      %1106 = vmatprep.subr.mxu0 0.0
      %1107 = vmatpush1.msra.mxu0 0.0
      %1108 = vmatprep.subr.mxu0 0.0
      %1109 = vmatpush1.msra.mxu0 0.0
      %1110 = vmatprep.subr.mxu0 0.0
      %1111 = vmatpush1.msra.mxu0 0.0
      %1112 = vmatprep.subr.mxu0 0.0
      %1113 = vmatpush1.msra.mxu0 0.0
      %1114 = vmatprep.subr.mxu0 0.0
      %1115 = vmatpush1.msra.mxu0 0.0
      %1116 = vmatprep.subr.mxu0 0.0
      %1117 = vmatpush1.msra.mxu0 0.0
      %1118 = vmatprep.subr.mxu0 0.0
      %1119 = vmatpush1.msra.mxu0 0.0
      %1120 = vmatprep.subr.mxu0 0.0
      %1121 = vmatpush1.msra.mxu0 0.0
      %1122 = vmatprep.subr.mxu0 0.0
      %1123 = vmatpush1.msra.mxu0 0.0
      %1124 = vmatprep.subr.mxu0 0.0
      %1125 = vmatpush1.msra.mxu0 0.0
      %1126 = vmatprep.subr.mxu0 0.0
      %1127 = vmatpush1.msra.mxu0 0.0
      %1128 = vmatprep.subr.mxu0 0.0
      %1129 = vmatpush1.msra.mxu0 0.0
      %1130 = vmatprep.subr.mxu0 0.0
      %1131 = vmatpush1.msra.mxu0 0.0
      %1132 = vmatprep.subr.mxu0 0.0
      %1133 = vmatpush1.msra.mxu0 0.0
      %1134 = vmatprep.subr.mxu0 0.0
      %1135 = vmatpush1.msra.mxu0 0.0
      %1136 = vmatprep.subr.mxu0 0.0
      %1137 = vmatpush1.msra.mxu0 0.0
      %1138 = vmatprep.mubr.f32.mxu0 0.0
      %1139 = vmatmul.mubr.f32.gmra.mrb[0].mxu0 %v1027
      %v1140 = vpop.f32.mrb[0].mxu0
      %v1141 = vadd.f32 %v1023, %v1140
      %v1142 = vpop.f32.mrb[0].mxu0
      %1143 = vmatprep.mubr.f32.mxu0 0.0
      %1144 = vmatmul.mubr.f32.gmra.mrb[0].mxu0 %v1030
      %v1145 = vpop.f32.mrb[0].mxu0
      %v1146 = vadd.f32 %v1023, %v1145
      %v1147 = vpop.f32.mrb[0].mxu0
      %1148 = vmatprep.mubr.f32.mxu0 0.0
      %1149 = vmatmul.mubr.f32.gmra.mrb[0].mxu0 %v1033
      %v1150 = vpop.f32.mrb[0].mxu0
      %v1151 = vadd.f32 %v1023, %v1150
      %v1152 = vpop.f32.mrb[0].mxu0
      %1153 = vmatprep.mubr.f32.mxu0 0.0
      %1154 = vmatmul.mubr.f32.gmra.mrb[0].mxu0 %v1036
      %v1155 = vpop.f32.mrb[0].mxu0
      %v1156 = vadd.f32 %v1023, %v1155
      %v1157 = vpop.f32.mrb[0].mxu0
      %1158 = vmatprep.mubr.f32.mxu0 0.0
      %1159 = vmatmul.mubr.f32.gmra.mrb[0].mxu0 %v1039
      %v1160 = vpop.f32.mrb[0].mxu0
      %v1161 = vadd.f32 %v1023, %v1160
      %v1162 = vpop.f32.mrb[0].mxu0
      %1163 = vmatprep.mubr.f32.mxu0 0.0
      %1164 = vmatmul.mubr.f32.gmra.mrb[0].mxu0 %v1042
      %v1165 = vpop.f32.mrb[0].mxu0
      %v1166 = vadd.f32 %v1023, %v1165
      %v1167 = vpop.f32.mrb[0].mxu0
      %1168 = vmatprep.mubr.f32.mxu0 0.0
      %1169 = vmatmul.mubr.f32.gmra.mrb[0].mxu0 %v1045
      %v1170 = vpop.f32.mrb[0].mxu0
      %v1171 = vadd.f32 %v1023, %v1170
      %v1172 = vpop.f32.mrb[0].mxu0
      %1173 = vmatprep.mubr.f32.mxu0 0.0
      %1174 = vmatmul.mubr.f32.gmra.mrb[0].mxu0 %v1048
      %v1175 = vpop.f32.mrb[0].mxu0
      %v1176 = vadd.f32 %v1023, %v1175
      %v1177 = vpop.f32.mrb[0].mxu0
      %1178 = vmatprep.mubr.f32.mxu0 0.0
      %1179 = vmatmul.mubr.f32.gmra.mrb[0].mxu0 %v1051
      %v1180 = vpop.f32.mrb[0].mxu0
      %v1181 = vadd.f32 %v1023, %v1180
      %v1182 = vpop.f32.mrb[0].mxu0
      %1183 = vmatprep.mubr.f32.mxu0 0.0
      %1184 = vmatmul.mubr.f32.gmra.mrb[0].mxu0 %v1054
      %v1185 = vpop.f32.mrb[0].mxu0
      %v1186 = vadd.f32 %v1023, %v1185
      %v1187 = vpop.f32.mrb[0].mxu0
      %1188 = vmatprep.mubr.f32.mxu0 0.0
      %1189 = vmatmul.mubr.f32.gmra.mrb[0].mxu0 %v1057
      %v1190 = vpop.f32.mrb[0].mxu0
      %v1191 = vadd.f32 %v1023, %v1190
      %v1192 = vpop.f32.mrb[0].mxu0
      %1193 = vmatprep.mubr.f32.mxu0 0.0
      %1194 = vmatmul.mubr.f32.gmra.mrb[0].mxu0 %v1060
      %v1195 = vpop.f32.mrb[0].mxu0
      %v1196 = vadd.f32 %v1023, %v1195
      %v1197 = vpop.f32.mrb[0].mxu0
      %1198 = vmatprep.mubr.f32.mxu0 0.0
      %1199 = vmatmul.mubr.f32.gmra.mrb[0].mxu0 %v1063
      %v1200 = vpop.f32.mrb[0].mxu0
      %v1201 = vadd.f32 %v1023, %v1200
      %v1202 = vpop.f32.mrb[0].mxu0
      %1203 = vmatprep.mubr.f32.mxu0 0.0
      %1204 = vmatmul.mubr.f32.gmra.mrb[0].mxu0 %v1066
      %v1205 = vpop.f32.mrb[0].mxu0
      %v1206 = vadd.f32 %v1023, %v1205
      %v1207 = vpop.f32.mrb[0].mxu0
      %1208 = vmatprep.mubr.f32.mxu0 0.0
      %1209 = vmatmul.mubr.f32.gmra.mrb[0].mxu0 %v1069
      %v1210 = vpop.f32.mrb[0].mxu0
      %v1211 = vadd.f32 %v1023, %v1210
      %v1212 = vpop.f32.mrb[0].mxu0
      %1213 = vmatprep.mubr.f32.mxu0 0.0
      %1214 = vmatmul.mubr.f32.gmra.mrb[0].mxu0 %v1072
      %v1215 = vpop.f32.mrb[0].mxu0
      %v1216 = vadd.f32 %v1023, %v1215
      %v1217 = vpop.f32.mrb[0].mxu0
      %1218 = vdwg.mxu0
      %v1219 = vlaneseq
      %v1220 = vand.u32 %v1219, 127
      %v1221 = vmax.f32 %v1141, 0.0
      %v1222 = vmax.f32 %v1146, 0.0
      %v1223 = vmax.f32 %v1151, 0.0
      %v1224 = vmax.f32 %v1156, 0.0
      %v1225 = vmax.f32 %v1161, 0.0
      %v1226 = vmax.f32 %v1166, 0.0
      %v1227 = vmax.f32 %v1171, 0.0
      %v1228 = vmax.f32 %v1176, 0.0
      %v1229 = vmax.f32 %v1181, 0.0
      %v1230 = vmax.f32 %v1186, 0.0
      %v1231 = vmax.f32 %v1191, 0.0
      %v1232 = vmax.f32 %v1196, 0.0
      %v1233 = vmax.f32 %v1201, 0.0
      %v1234 = vmax.f32 %v1206, 0.0
      %v1235 = vmax.f32 %v1211, 0.0
      %v1236 = vmax.f32 %v1216, 0.0
      %v1237 = vmul.f32 %v1141, 0.5
      %v1238 = vmul.f32 %v1146, 0.5
      %v1239 = vmul.f32 %v1151, 0.5
      %v1240 = vmul.f32 %v1156, 0.5
      %v1241 = vmul.f32 %v1161, 0.5
      %v1242 = vmul.f32 %v1166, 0.5
      %v1243 = vmul.f32 %v1171, 0.5
      %v1244 = vmul.f32 %v1176, 0.5
      %v1245 = vmul.f32 %v1181, 0.5
      %v1246 = vmul.f32 %v1186, 0.5
      %v1247 = vmul.f32 %v1191, 0.5
      %v1248 = vmul.f32 %v1196, 0.5
      %v1249 = vmul.f32 %v1201, 0.5
      %v1250 = vmul.f32 %v1206, 0.5
      %v1251 = vmul.f32 %v1211, 0.5
      %v1252 = vmul.f32 %v1216, 0.5
      %v1253 = vtanh.pop %v1237
      %v1254 = vtanh.pop %v1238
      %v1255 = vtanh.pop %v1239
      %v1256 = vtanh.pop %v1240
      %v1257 = vtanh.pop %v1241
      %v1258 = vtanh.pop %v1242
      %v1259 = vtanh.pop %v1243
      %v1260 = vtanh.pop %v1244
      %v1261 = vtanh.pop %v1245
      %v1262 = vtanh.pop %v1246
      %v1263 = vtanh.pop %v1247
      %v1264 = vtanh.pop %v1248
      %v1265 = vtanh.pop %v1249
      %v1266 = vtanh.pop %v1250
      %v1267 = vtanh.pop %v1251
      %v1268 = vtanh.pop %v1252
      %v1269 = vadd.f32 %v1253, 1.0
      %v1270 = vadd.f32 %v1254, 1.0
      %v1271 = vadd.f32 %v1255, 1.0
      %v1272 = vadd.f32 %v1256, 1.0
      %v1273 = vadd.f32 %v1257, 1.0
      %v1274 = vadd.f32 %v1258, 1.0
      %v1275 = vadd.f32 %v1259, 1.0
      %v1276 = vadd.f32 %v1260, 1.0
      %v1277 = vadd.f32 %v1261, 1.0
      %v1278 = vadd.f32 %v1262, 1.0
      %v1279 = vadd.f32 %v1263, 1.0
      %v1280 = vadd.f32 %v1264, 1.0
      %v1281 = vadd.f32 %v1265, 1.0
      %v1282 = vadd.f32 %v1266, 1.0
      %v1283 = vadd.f32 %v1267, 1.0
      %v1284 = vadd.f32 %v1268, 1.0
      %v1285 = vmul.f32 %v1269, 0.5
      %v1286 = vmul.f32 %v1270, 0.5
      %v1287 = vmul.f32 %v1271, 0.5
      %v1288 = vmul.f32 %v1272, 0.5
      %v1289 = vmul.f32 %v1273, 0.5
      %v1290 = vmul.f32 %v1274, 0.5
      %v1291 = vmul.f32 %v1275, 0.5
      %v1292 = vmul.f32 %v1276, 0.5
      %v1293 = vmul.f32 %v1277, 0.5
      %v1294 = vmul.f32 %v1278, 0.5
      %v1295 = vmul.f32 %v1279, 0.5
      %v1296 = vmul.f32 %v1280, 0.5
      %v1297 = vmul.f32 %v1281, 0.5
      %v1298 = vmul.f32 %v1282, 0.5
      %v1299 = vmul.f32 %v1283, 0.5
      %v1300 = vmul.f32 %v1284, 0.5
      %vm1301 = vcmp.lt.s32.totalorder %v1220, 8
      %v1302 = vsel %vm1301, %v1221, %v1285
      %v1303 = vsel %vm1301, %v1222, %v1286
      %v1304 = vsel %vm1301, %v1223, %v1287
      %v1305 = vsel %vm1301, %v1224, %v1288
      %v1306 = vsel %vm1301, %v1225, %v1289
      %v1307 = vsel %vm1301, %v1226, %v1290
      %v1308 = vsel %vm1301, %v1227, %v1291
      %v1309 = vsel %vm1301, %v1228, %v1292
      %v1310 = vsel %vm1301, %v1229, %v1293
      %v1311 = vsel %vm1301, %v1230, %v1294
      %v1312 = vsel %vm1301, %v1231, %v1295
      %v1313 = vsel %vm1301, %v1232, %v1296
      %v1314 = vsel %vm1301, %v1233, %v1297
      %v1315 = vsel %vm1301, %v1234, %v1298
      %v1316 = vsel %vm1301, %v1235, %v1299
      %v1317 = vsel %vm1301, %v1236, %v1300
      %1318 = vst.msk [vmem:[%s334] sm:$0xff] %vm361, %v1302
      %1319 = vst.msk [vmem:[%s334 + $0x8] sm:$0xff] %vm361, %v1303
      %1320 = vst.msk [vmem:[%s334 + $0x10] sm:$0xff] %vm361, %v1304
      %1321 = vst.msk [vmem:[%s334 + $0x18] sm:$0xff] %vm361, %v1305
      %1322 = vst.msk [vmem:[%s334 + $0x20] sm:$0xff] %vm361, %v1306
      %1323 = vst.msk [vmem:[%s334 + $0x28] sm:$0xff] %vm361, %v1307
      %1324 = vst.msk [vmem:[%s334 + $0x30] sm:$0xff] %vm361, %v1308
      %1325 = vst.msk [vmem:[%s334 + $0x38] sm:$0xff] %vm361, %v1309
      %1326 = vst.msk [vmem:[%s334 + $0x40] sm:$0xff] %vm361, %v1310
      %1327 = vst.msk [vmem:[%s334 + $0x48] sm:$0xff] %vm361, %v1311
      %1328 = vst.msk [vmem:[%s334 + $0x50] sm:$0xff] %vm361, %v1312
      %1329 = vst.msk [vmem:[%s334 + $0x58] sm:$0xff] %vm361, %v1313
      %1330 = vst.msk [vmem:[%s334 + $0x60] sm:$0xff] %vm361, %v1314
      %1331 = vst.msk [vmem:[%s334 + $0x68] sm:$0xff] %vm361, %v1315
      %1332 = vst.msk [vmem:[%s334 + $0x70] sm:$0xff] %vm361, %v1316
      %1333 = vst.msk [vmem:[%s334 + $0x78] sm:$0xff] %vm361, %v1317
      %s1334 = smul.u32 16, %s20
      %p1335 = scmp.lt.s32.totalorder %s1334, 31
      %s1336 = scalar_select %p1335, %s1334, 31
      %s1337 = smul.addr %s1336, 8
      %s1338 = scalar_lea.vmem %s9, %s1337
      // Predicated region
      $region57: #{tpu_custom_call.1} parent=55 // pred_check
        %p1339 = pneg %p232
      $region58: #{tpu_custom_call.1} parent=55 // pred_check_branch
        %1341 = sbr.rel (%p1339) target = $region60
      $region59: #{tpu_custom_call.1} parent=55 // pred_region
        %s1342 = smul.u32 16, %s20
      $region60: #{tpu_custom_call.1} parent=55 // pred_fallthru
        _
    $region56: #{tpu_custom_call.1} parent=5 // pred_fallthru
      _
    %p1343 = scmp.le.s32.totalorder 2, %s15
    // Predicated region
    $region61: #{tpu_custom_call.1} parent=5 // pred_check
      %p1344 = pneg %p1343
    $region62: #{tpu_custom_call.1} parent=5 // pred_check_branch
      %1346 = sbr.rel (%p1344) target = $region64
    $region63: #{tpu_custom_call.1} parent=5 // pred_region
      %s1347 = ssub.s32 %s15, 2
      // Predicated region
      $region65: #{tpu_custom_call.1} parent=63 // pred_check
        %p1348 = pneg %p238
      $region66: #{tpu_custom_call.1} parent=63 // pred_check_branch
        %1350 = sbr.rel (%p1348) target = $region68
      $region67: #{tpu_custom_call.1} parent=63 // pred_region
        %s1351 = smul.u32 16, %s21
        %p1352 = scmp.lt.s32.totalorder %s1351, 31
        %s1353 = scalar_select %p1352, %s1351, 31
        %s1354 = smul.addr %s1353, 8
        %s1355 = scalar_lea.vmem %s9, %s1354
      $region68: #{tpu_custom_call.1} parent=63 // pred_fallthru
        _
    $region64: #{tpu_custom_call.1} parent=5 // pred_fallthru
      _
  $region6: #{tpu_custom_call.1} parent=0 // loop_footer
    %s19 = sadd.s32 1, %s15
  $region7: #{tpu_custom_call.1} parent=0 // loop_footer_branch
    %14 = sbr.rel target = $region3
  $region8: #{tpu_custom_call.1} parent=0 // loop_exit
    _

</llo_original>
